<compile_context>
chip_gen: v5e
topology: v5e:2x2
jax: 0.10.0
libtpu: 0.0.40
codegen_flags: <defaults>
</compile_context>

<pallas_src>
import jax
import jax.numpy as jnp
import numpy as np
from jax.experimental import pallas as pl
from jax.experimental.pallas import tpu as pltpu


def _att_pool_kernel(h_ref, w1t_ref, b1_ref, w2_ref, b2_ref, o_ref):
    tb, S, H = h_ref.shape
    h3 = h_ref[...]                                   # (TB, S, H) bf16
    x2 = h3.reshape(tb * S, H)                        # merge leading dims (free)

    # --- linear[0]: Linear(H, H) + ReLU --------------------------------------
    # Pre-transposed bf16 weight -> plain x @ w1t on the MXU, f32 accumulation.
    t = jnp.dot(x2, w1t_ref[...], preferred_element_type=jnp.float32)
    t = jnp.maximum(t + b1_ref[...], 0.0)             # (TB*S, H) f32

    # --- (Dropout: identity at inference) ------------------------------------

    # --- linear[-1]: Linear(H, 1) as a VPU multiply + lane reduction ---------
    t3 = t.reshape(tb, S, H)
    score = jnp.sum(t3 * w2_ref[...], axis=-1) + b2_ref[...]   # (TB, S) f32

    # --- softmax over the sequence axis (per batch row), f32 -----------------
    m = jnp.max(score, axis=-1, keepdims=True)
    e = jnp.exp(score - m)
    denom = jnp.sum(e, axis=-1, keepdims=True)
    probs = e * pl.reciprocal(denom, approx=True)     # (TB, S)

    # --- weighted sum over tokens: sum_S probs * hidden -> (TB, H) -----------
    pooled = jnp.sum(h3.astype(jnp.float32) * probs[:, :, None], axis=1)

    o_ref[...] = pooled.astype(o_ref.dtype)           # lane/sublane-dense store


def _choose_tb(batch, seq):
    """Pick TB so TB*S ~= 256 rows per grid step, keep >=2 grid steps (v7x)."""
    tb = max(1, 256 // max(seq, 1))
    tb = min(tb, batch)
    while tb > 1 and (batch % tb != 0 or batch // tb < 2):
        tb -= 1
    return tb


def bert_att_pooler(hidden_states, params, *, tb=None):
    """hidden_states: (B, S, H) float32.  params: PyTorch-layout weights."""
    B, S, H = hidden_states.shape
    if tb is None:
        tb = _choose_tb(B, S)
    assert B % tb == 0, "batch must be divisible by the per-step batch tile"

    # Host-side packing: cast MXU operands to bf16 and pre-transpose weights.
    hs = hidden_states.astype(jnp.bfloat16)                      # (B, S, H)
    w1t = jnp.asarray(params["w1"]).T.astype(jnp.bfloat16)       # (H, H) = w1.T
    b1 = jnp.asarray(params["b1"], jnp.float32).reshape(1, H)    # (1, H)
    w2 = jnp.asarray(params["w2"], jnp.float32).reshape(1, H)    # (1, H) row
    b2 = jnp.asarray(params["b2"], jnp.float32).reshape(1, 1)    # (1, 1)

    cost = pl.CostEstimate(
        flops=2 * B * S * H * H + 4 * B * S * H,
        transcendentals=B * S,
        bytes_accessed=B * S * H * 2 + H * H * 2 + (2 * H + 1) * 4 + B * H * 4,
    )

    grid_spec = pltpu.PrefetchScalarGridSpec(
        num_scalar_prefetch=0,
        grid=(B // tb,),
        in_specs=[
            pl.BlockSpec((tb, S, H), lambda b: (b, 0, 0)),   # hidden (bf16)
            pl.BlockSpec((H, H), lambda b: (0, 0)),          # w1.T (bf16)
            pl.BlockSpec((1, H), lambda b: (0, 0)),          # b1
            pl.BlockSpec((1, H), lambda b: (0, 0)),          # w2 row
            pl.BlockSpec((1, 1), lambda b: (0, 0)),          # b2
        ],
        out_specs=pl.BlockSpec((tb, H), lambda b: (b, 0)),
    )

    pooled = pl.pallas_call(
        _att_pool_kernel,
        out_shape=jax.ShapeDtypeStruct((B, H), jnp.float32),
        grid_spec=grid_spec,
        compiler_params=pltpu.CompilerParams(
            dimension_semantics=("parallel",)),
        cost_estimate=cost,
    )(hs, w1t, b1, w2, b2)

    # --- embed: Linear(H, H) hoisted out of the kernel (dense XLA matmul) ----
    we_t = jnp.asarray(params["we"], jnp.float32).T              # (H, H)
    be = jnp.asarray(params["be"], jnp.float32).reshape(1, H)    # (1, H)
    return pooled @ we_t + be


def bert_att_pooler_ref(hidden_states, params):
    """Pure-JAX f32 reference mirroring the PyTorch BertAttPooler.forward."""
    t = jnp.maximum(hidden_states @ params["w1"].T + params["b1"], 0.0)
    score = (t @ params["w2"].T + params["b2"])[..., 0]          # (B, S)
    probs = jax.nn.softmax(score, axis=-1)
    pooled = jnp.einsum("bs,bsh->bh", probs, hidden_states)
    return pooled @ params["we"].T + params["be"]


if __name__ == "__main__":
    # Small shapes: S % 8 == 0 and H % 128 == 0 (pad S in the wrapper for
    # arbitrary BERT sequence lengths).
    B, S, H = 16, 32, 128

    key = jax.random.PRNGKey(0)
    k_h, k_w1, k_b1, k_w2, k_b2, k_we, k_be = jax.random.split(key, 7)

    hidden_states = jax.random.normal(k_h, (B, S, H), dtype=jnp.float32)

    bound = 1.0 / np.sqrt(H)
    params = {
        "w1": jax.random.uniform(k_w1, (H, H), jnp.float32, -bound, bound),
        "b1": jax.random.uniform(k_b1, (H,), jnp.float32, -bound, bound),
        "w2": jax.random.uniform(k_w2, (1, H), jnp.float32, -bound, bound),
        "b2": jax.random.uniform(k_b2, (1,), jnp.float32, -bound, bound),
        "we": jax.random.uniform(k_we, (H, H), jnp.float32, -bound, bound),
        "be": jax.random.uniform(k_be, (H,), jnp.float32, -bound, bound),
    }

    out = jax.block_until_ready(bert_att_pooler(hidden_states, params))
    ref = jax.block_until_ready(bert_att_pooler_ref(hidden_states, params))

    # bf16 MXU operands + approx reciprocal -> loosened tolerance vs f32 ref.
    np.testing.assert_allclose(np.asarray(out), np.asarray(ref),
                               rtol=2e-2, atol=2e-2)

    print("KERNEL_OK")
</pallas_src>

<mosaic_0001>
module attributes {stable_mosaic.version = 11 : i64} {
  func.func @_att_pool_kernel(%arg0: i32, %arg1: memref<8x32x128xbf16, #tpu.memory_space<vmem>>, %arg2: memref<128x128xbf16, #tpu.memory_space<vmem>>, %arg3: memref<1x128xf32, #tpu.memory_space<vmem>>, %arg4: memref<1x128xf32, #tpu.memory_space<vmem>>, %arg5: memref<1x1xf32, #tpu.memory_space<vmem>>, %arg6: memref<8x128xf32, #tpu.memory_space<vmem>>) attributes {dimension_semantics = [#tpu.dimension_semantics<parallel>], iteration_bounds = array<i64: 2>, scalar_prefetch = 0 : i64, scratch_operands = 0 : i64, tpu.core_type = #tpu.core_type<tc>, window_params = [{transform_indices = @transform_0, window_bounds = array<i64: 8, 32, 128>}, {pipeline_mode = #tpu.pipeline_mode<synchronous>, transform_indices = @transform_1, window_bounds = array<i64: 128, 128>}, {pipeline_mode = #tpu.pipeline_mode<synchronous>, transform_indices = @transform_2, window_bounds = array<i64: 1, 128>}, {pipeline_mode = #tpu.pipeline_mode<synchronous>, transform_indices = @transform_3, window_bounds = array<i64: 1, 128>}, {pipeline_mode = #tpu.pipeline_mode<synchronous>, transform_indices = @transform_4, window_bounds = array<i64: 1, 1>}, {transform_indices = @transform_5, window_bounds = array<i64: 8, 128>}]} {
    %c0 = arith.constant 0 : index
    %c0_0 = arith.constant 0 : index
    %c0_1 = arith.constant 0 : index
    %0 = vector.load %arg1[%c0, %c0_0, %c0_1] : memref<8x32x128xbf16, #tpu.memory_space<vmem>>, vector<8x32x128xbf16>
    %1 = vector.shape_cast %0 : vector<8x32x128xbf16> to vector<256x128xbf16>
    %c0_2 = arith.constant 0 : index
    %c0_3 = arith.constant 0 : index
    %2 = vector.load %arg2[%c0_2, %c0_3] : memref<128x128xbf16, #tpu.memory_space<vmem>>, vector<128x128xbf16>
    %cst = arith.constant dense<0.000000e+00> : vector<256x128xf32>
    %3 = tpu.matmul %1, %2, %cst {dimension_numbers = #tpu.dot_dimension_numbers<[1], [0], [0], [1], [0, 0, 1, 1], [], []>} : vector<256x128xbf16>, vector<128x128xbf16>, vector<256x128xf32> -> vector<256x128xf32>
    %c0_4 = arith.constant 0 : index
    %c0_5 = arith.constant 0 : index
    %4 = vector.load %arg3[%c0_4, %c0_5] : memref<1x128xf32, #tpu.memory_space<vmem>>, vector<1x128xf32>
    %5 = vector.broadcast %4 : vector<1x128xf32> to vector<256x128xf32>
    %6 = arith.addf %3, %5 : vector<256x128xf32>
    %cst_6 = arith.constant 0.000000e+00 : f32
    %7 = vector.broadcast %cst_6 : f32 to vector<256x128xf32>
    %8 = arith.maximumf %6, %7 : vector<256x128xf32>
    %9 = vector.shape_cast %8 : vector<256x128xf32> to vector<8x32x128xf32>
    %c0_7 = arith.constant 0 : index
    %c0_8 = arith.constant 0 : index
    %10 = vector.load %arg4[%c0_7, %c0_8] : memref<1x128xf32, #tpu.memory_space<vmem>>, vector<1x128xf32>
    %11 = vector.shape_cast %10 : vector<1x128xf32> to vector<1x1x128xf32>
    %12 = vector.broadcast %11 : vector<1x1x128xf32> to vector<8x32x128xf32>
    %13 = arith.mulf %9, %12 : vector<8x32x128xf32>
    %cst_9 = arith.constant dense<0.000000e+00> : vector<8x32xf32>
    %14 = vector.multi_reduction <add>, %13, %cst_9 [2] : vector<8x32x128xf32> to vector<8x32xf32>
    %c0_10 = arith.constant 0 : index
    %c0_11 = arith.constant 0 : index
    %15 = vector.load %arg5[%c0_10, %c0_11] : memref<1x1xf32, #tpu.memory_space<vmem>>, vector<1x1xf32>
    %16 = vector.broadcast %15 : vector<1x1xf32> to vector<8x32xf32>
    %17 = arith.addf %14, %16 : vector<8x32xf32>
    %cst_12 = arith.constant dense<0xFF800000> : vector<8xf32>
    %18 = vector.multi_reduction <maximumf>, %17, %cst_12 [1] : vector<8x32xf32> to vector<8xf32>
    %19 = vector.shape_cast %18 : vector<8xf32> to vector<8x1xf32>
    %20 = vector.broadcast %19 : vector<8x1xf32> to vector<8x32xf32>
    %21 = arith.subf %17, %20 : vector<8x32xf32>
    %22 = math.exp %21 : vector<8x32xf32>
    %cst_13 = arith.constant dense<0.000000e+00> : vector<8xf32>
    %23 = vector.multi_reduction <add>, %22, %cst_13 [1] : vector<8x32xf32> to vector<8xf32>
    %24 = vector.shape_cast %23 : vector<8xf32> to vector<8x1xf32>
    %25 = tpu.reciprocal %24 {approx = true} : vector<8x1xf32> -> vector<8x1xf32>
    %26 = vector.broadcast %25 : vector<8x1xf32> to vector<8x32xf32>
    %27 = arith.mulf %22, %26 : vector<8x32xf32>
    %28 = arith.extf %0 : vector<8x32x128xbf16> to vector<8x32x128xf32>
    %29 = vector.shape_cast %27 : vector<8x32xf32> to vector<8x32x1xf32>
    %30 = vector.broadcast %29 : vector<8x32x1xf32> to vector<8x32x128xf32>
    %31 = arith.mulf %28, %30 : vector<8x32x128xf32>
    %cst_14 = arith.constant dense<0.000000e+00> : vector<8x128xf32>
    %32 = vector.multi_reduction <add>, %31, %cst_14 [1] : vector<8x32x128xf32> to vector<8x128xf32>
    %c0_15 = arith.constant 0 : index
    %c0_16 = arith.constant 0 : index
    %33 = vector.load %arg6[%c0_15, %c0_16] : memref<8x128xf32, #tpu.memory_space<vmem>>, vector<8x128xf32>
    tpu.vector_store %arg6[%c0_15, %c0_16], %32 {strides = array<i32>} : memref<8x128xf32, #tpu.memory_space<vmem>>, vector<8x128xf32>,
    return
  }
  func.func @transform_0(%arg0: i32) -> (i32, i32, i32) {
    %c0_i32 = arith.constant 0 : i32
    %c0_i32_0 = arith.constant 0 : i32
    %c0_i32_1 = arith.constant 0 : i32
    return %arg0, %c0_i32, %c0_i32_0 : i32, i32, i32
  }
  func.func @transform_1(%arg0: i32) -> (i32, i32) {
    %c0_i32 = arith.constant 0 : i32
    %c0_i32_0 = arith.constant 0 : i32
    %c0_i32_1 = arith.constant 0 : i32
    return %c0_i32, %c0_i32_0 : i32, i32
  }
  func.func @transform_2(%arg0: i32) -> (i32, i32) {
    %c0_i32 = arith.constant 0 : i32
    %c0_i32_0 = arith.constant 0 : i32
    %c0_i32_1 = arith.constant 0 : i32
    return %c0_i32, %c0_i32_0 : i32, i32
  }
  func.func @transform_3(%arg0: i32) -> (i32, i32) {
    %c0_i32 = arith.constant 0 : i32
    %c0_i32_0 = arith.constant 0 : i32
    %c0_i32_1 = arith.constant 0 : i32
    return %c0_i32, %c0_i32_0 : i32, i32
  }
  func.func @transform_4(%arg0: i32) -> (i32, i32) {
    %c0_i32 = arith.constant 0 : i32
    %c0_i32_0 = arith.constant 0 : i32
    %c0_i32_1 = arith.constant 0 : i32
    return %c0_i32, %c0_i32_0 : i32, i32
  }
  func.func @transform_5(%arg0: i32) -> (i32, i32) {
    %c0_i32 = arith.constant 0 : i32
    %c0_i32_0 = arith.constant 0 : i32
    return %arg0, %c0_i32 : i32, i32
  }
}

</mosaic_0001>

<llo_original>
// kernel: tpu_custom_call.1
$region0: #{tpu_custom_call.1}
  #allocation0 [shape = 'u32[]', space=smem, size = 0x4, offset = 0x4, fixed_abs, tag = 'smem constant byte address 0x4 - core index']
  #allocation1 [shape = 'u32[72,128]{1,0:T(1,128)}', space=vmem, size = 0x9000, scoped, tag = 'internal scratch']
  #allocation2 [shape = 'f32[1,1]{1,0:T(1,128)S(1)}', space=vmem, size = 0x200, scoped, tag = 'scoped memory for tpu_custom_call.1']
  %s0 = inlined_call_operand.hbm [shape: bf16[16,32,128], index: 0, kind: input, shape index: {}]
  %s1 = inlined_call_operand.hbm [shape: bf16[128,128], index: 1, kind: input, shape index: {}]
  %s2 = inlined_call_operand.vmem [shape: f32[1,128], index: 2, kind: input, shape index: {}]
  %s3 = inlined_call_operand.vmem [shape: f32[1,128], index: 3, kind: input, shape index: {}]
  %s4 = inlined_call_operand.<no memory space> [shape: f32[1,1], index: 4, kind: input, shape index: {}]
  %s5 = inlined_call_operand.hbm [shape: f32[16,128], index: 5, kind: output, shape index: {}]
  %s6 = sld [smem:[#allocation0]]
  $region61: #{tpu_custom_call.1} parent=0
    _
  %s8 = ssub.s32 1, %s6
  %s9 = scalar_select 0, %s8, %s6
  %v10 = vstv %s4
  %11 = vst [vmem:[#allocation2] sm:$0x1] %v10
  $region1: #{tpu_custom_call.1} parent=0
    #allocation3 [shape = 'u8[131072]{0}', space=vmem, size = 0x20000, scoped, tag = 'input window, operand 0']
    #allocation4 [shape = 's32[2]{0}', space=sflag, size = 0x8, scoped, tag = 'scoped memory for tpu_custom_call.1']
    #allocation5 [shape = 's32[2]{0}', space=sflag, size = 0x8, scoped, tag = 'scoped memory for tpu_custom_call.1']
    #allocation6 [shape = 'u8[32768]{0}', space=vmem, size = 0x8000, scoped, tag = 'input window, operand 1, single buffered']
    #allocation7 [shape = 's32[1]{0}', space=sflag, size = 0x4, scoped, tag = 'scoped memory for tpu_custom_call.1']
    #allocation8 [shape = 'u8[8192]{0}', space=vmem, size = 0x2000, scoped, tag = 'output window, operand 0']
    %12 = vsyncpa [#allocation4], 0
    %s13 = scalar_lea.sflag [#allocation4], 1
    %14 = vsyncpa %s13, 0
    %15 = vsyncpa [#allocation7], 0
    %16 = vsyncpa [#allocation5], 0
    %s17 = scalar_lea.sflag [#allocation5], 1
    %18 = vsyncpa %s17, 0
    loop: start=0, step=1, limit=4
    $region2: #{tpu_custom_call.1} parent=1 // loop_pre_header
      _
    $region3: #{tpu_custom_call.1} parent=1 // loop_header
      %s20 = sphi 0, %s24
      %p21 = scmp.ge.s32.totalorder %s20, 4
      %s30 = sphi 0, %s32
      %s33 = sphi 0, %s30
      %s34 = sphi 0, %s33
      %s50 = sphi 0, %s34
      %s54 = sphi 0, %s54
      %s56 = sphi 0, %s54
      %s57 = sphi 0, %s56
      %s71 = sphi 0, %s57
      %s75 = sphi 0, %s75
      %s77 = sphi 0, %s75
      %s78 = sphi 0, %s77
      %s92 = sphi 0, %s78
      %s96 = sphi 0, %s96
      %s98 = sphi 0, %s96
      %s99 = sphi 0, %s98
      %s113 = sphi 0, %s99
      %s117 = sphi 0, %s117
      %s119 = sphi 0, %s117
      %s120 = sphi 0, %s119
      %s134 = sphi 0, %s120
      %s140 = sphi 0, %s142
      %s143 = sphi 0, %s140
      %s144 = sphi 0, %s143
      %s160 = sphi 0, %s144
    $region4: #{tpu_custom_call.1} parent=1 // loop_header_branch
      %23 = sbr.rel (%p21) target = $region8
    $region5: #{tpu_custom_call.1} parent=1 // loop_body
      %s25 = ssub.s32 %s20, 1
      %s26 = ssub.s32 %s20, 2
      %s27 = sadd.s32 %s20, 1
      %s28 = ssub.s32 %s20, %s27
      %p29 = scmp.eq.s32.totalorder %s28, 0
      %s31 = sadd.s32 %s30, 1
      %s32 = scalar_select %p29, %s30, %s31
      %p35 = pneg %p29
      %p36 = scmp.eq.s32.totalorder %s20, 1
      %p37 = por %p35, %p36
      %p38 = scmp.ne.s32.totalorder %s30, %s33
      %p39 = scmp.eq.s32.totalorder %s20, 0
      %p40 = por %p38, %p39
      %p41 = scmp.ne.s32.totalorder %s30, %s33
      %p42 = scmp.eq.s32.totalorder %s25, 1
      %p43 = por %p41, %p42
      %p44 = scmp.ne.s32.totalorder %s33, %s34
      %p45 = scmp.eq.s32.totalorder %s25, 0
      %p46 = por %p44, %p45
      %p47 = scmp.ne.s32.totalorder %s33, %s34
      %p48 = scmp.eq.s32.totalorder %s26, 1
      %p49 = por %p47, %p48
      %p51 = scmp.ne.s32.totalorder %s34, %s50
      %p52 = scmp.eq.s32.totalorder %s26, 0
      %p53 = por %p51, %p52
      %s55 = sadd.s32 %s54, 1
      %p58 = scmp.eq.s32.totalorder %s20, 1
      %p59 = scmp.ne.s32.totalorder %s54, %s56
      %p60 = scmp.eq.s32.totalorder %s20, 0
      %p61 = por %p59, %p60
      %p62 = scmp.ne.s32.totalorder %s54, %s56
      %p63 = scmp.eq.s32.totalorder %s25, 1
      %p64 = por %p62, %p63
      %p65 = scmp.ne.s32.totalorder %s56, %s57
      %p66 = scmp.eq.s32.totalorder %s25, 0
      %p67 = por %p65, %p66
      %p68 = scmp.ne.s32.totalorder %s56, %s57
      %p69 = scmp.eq.s32.totalorder %s26, 1
      %p70 = por %p68, %p69
      %p72 = scmp.ne.s32.totalorder %s57, %s71
      %p73 = scmp.eq.s32.totalorder %s26, 0
      %p74 = por %p72, %p73
      %s76 = sadd.s32 %s75, 1
      %p79 = scmp.eq.s32.totalorder %s20, 1
      %p80 = scmp.ne.s32.totalorder %s75, %s77
      %p81 = scmp.eq.s32.totalorder %s20, 0
      %p82 = por %p80, %p81
      %p83 = scmp.ne.s32.totalorder %s75, %s77
      %p84 = scmp.eq.s32.totalorder %s25, 1
      %p85 = por %p83, %p84
      %p86 = scmp.ne.s32.totalorder %s77, %s78
      %p87 = scmp.eq.s32.totalorder %s25, 0
      %p88 = por %p86, %p87
      %p89 = scmp.ne.s32.totalorder %s77, %s78
      %p90 = scmp.eq.s32.totalorder %s26, 1
      %p91 = por %p89, %p90
      %p93 = scmp.ne.s32.totalorder %s78, %s92
      %p94 = scmp.eq.s32.totalorder %s26, 0
      %p95 = por %p93, %p94
      %s97 = sadd.s32 %s96, 1
      %p100 = scmp.eq.s32.totalorder %s20, 1
      %p101 = scmp.ne.s32.totalorder %s96, %s98
      %p102 = scmp.eq.s32.totalorder %s20, 0
      %p103 = por %p101, %p102
      %p104 = scmp.ne.s32.totalorder %s96, %s98
      %p105 = scmp.eq.s32.totalorder %s25, 1
      %p106 = por %p104, %p105
      %p107 = scmp.ne.s32.totalorder %s98, %s99
      %p108 = scmp.eq.s32.totalorder %s25, 0
      %p109 = por %p107, %p108
      %p110 = scmp.ne.s32.totalorder %s98, %s99
      %p111 = scmp.eq.s32.totalorder %s26, 1
      %p112 = por %p110, %p111
      %p114 = scmp.ne.s32.totalorder %s99, %s113
      %p115 = scmp.eq.s32.totalorder %s26, 0
      %p116 = por %p114, %p115
      %s118 = sadd.s32 %s117, 1
      %p121 = scmp.eq.s32.totalorder %s20, 1
      %p122 = scmp.ne.s32.totalorder %s117, %s119
      %p123 = scmp.eq.s32.totalorder %s20, 0
      %p124 = por %p122, %p123
      %p125 = scmp.ne.s32.totalorder %s117, %s119
      %p126 = scmp.eq.s32.totalorder %s25, 1
      %p127 = por %p125, %p126
      %p128 = scmp.ne.s32.totalorder %s119, %s120
      %p129 = scmp.eq.s32.totalorder %s25, 0
      %p130 = por %p128, %p129
      %p131 = scmp.ne.s32.totalorder %s119, %s120
      %p132 = scmp.eq.s32.totalorder %s26, 1
      %p133 = por %p131, %p132
      %p135 = scmp.ne.s32.totalorder %s120, %s134
      %p136 = scmp.eq.s32.totalorder %s26, 0
      %p137 = por %p135, %p136
      %s138 = ssub.s32 %s20, %s27
      %p139 = scmp.eq.s32.totalorder %s138, 0
      %s141 = sadd.s32 %s140, 1
      %s142 = scalar_select %p139, %s140, %s141
      %p145 = pneg %p139
      %p146 = scmp.eq.s32.totalorder %s20, 1
      %p147 = por %p145, %p146
      %p148 = scmp.ne.s32.totalorder %s140, %s143
      %p149 = scmp.eq.s32.totalorder %s20, 0
      %p150 = por %p148, %p149
      %p151 = scmp.ne.s32.totalorder %s140, %s143
      %p152 = scmp.eq.s32.totalorder %s25, 1
      %p153 = por %p151, %p152
      %p154 = scmp.ne.s32.totalorder %s143, %s144
      %p155 = scmp.eq.s32.totalorder %s25, 0
      %p156 = por %p154, %p155
      %p157 = scmp.ne.s32.totalorder %s143, %s144
      %p158 = scmp.eq.s32.totalorder %s26, 1
      %p159 = por %p157, %p158
      %p161 = scmp.ne.s32.totalorder %s144, %s160
      %p162 = scmp.eq.s32.totalorder %s26, 0
      %p163 = por %p161, %p162
      %p164 = scmp.le.s32.totalorder 1, %s20
      %p165 = scmp.lt.s32.totalorder %s20, 3
      %p166 = pnand %p164, %p165
      %p167 = pneg %p166
      // Predicated region
      $region9: #{tpu_custom_call.1} parent=5 // pred_check
        _
      $region10: #{tpu_custom_call.1} parent=5 // pred_check_branch
        %169 = sbr.rel (%p166) target = $region12
      $region11: #{tpu_custom_call.1} parent=5 // pred_region
        %s170 = ssub.s32 %s20, 1
        // Predicated region
        $region13: #{tpu_custom_call.1} parent=11 // pred_check
          %p171 = pneg %p67
        $region14: #{tpu_custom_call.1} parent=11 // pred_check_branch
          %173 = sbr.rel (%p171) target = $region16
        $region15: #{tpu_custom_call.1} parent=11 // pred_region
          %175 = vsyncadd [#allocation7], 0
          %s176 = sshll.u32 %s1, 4
          %s177 = int_to_ptr.hbm [resolvable:$true] %s176
          %s178 = sshll.u32 [#allocation6], 4
          %s179 = int_to_ptr.vmem [resolvable:$true] %s178
          %184 = dma.hbm_to_vmem [thread:$0]  %s177, 1024, %s179, [#allocation7], 64, 64, 4
        $region16: #{tpu_custom_call.1} parent=11 // pred_fallthru
          _
        // Predicated region
        $region17: #{tpu_custom_call.1} parent=11 // pred_check
          %p185 = pneg %p88
        $region18: #{tpu_custom_call.1} parent=11 // pred_check_branch
          %187 = sbr.rel (%p185) target = $region20
        $region19: #{tpu_custom_call.1} parent=11 // pred_region
          _
        $region20: #{tpu_custom_call.1} parent=11 // pred_fallthru
          _
        // Predicated region
        $region21: #{tpu_custom_call.1} parent=11 // pred_check
          %p188 = pneg %p109
        $region22: #{tpu_custom_call.1} parent=11 // pred_check_branch
          %190 = sbr.rel (%p188) target = $region24
        $region23: #{tpu_custom_call.1} parent=11 // pred_region
          _
        $region24: #{tpu_custom_call.1} parent=11 // pred_fallthru
          _
        // Predicated region
        $region25: #{tpu_custom_call.1} parent=11 // pred_check
          %p191 = pneg %p130
        $region26: #{tpu_custom_call.1} parent=11 // pred_check_branch
          %193 = sbr.rel (%p191) target = $region28
        $region27: #{tpu_custom_call.1} parent=11 // pred_region
          _
        $region28: #{tpu_custom_call.1} parent=11 // pred_fallthru
          _
      $region12: #{tpu_custom_call.1} parent=5 // pred_fallthru
        _
      %p194 = scmp.lt.s32.totalorder %s20, 2
      // Predicated region
      $region29: #{tpu_custom_call.1} parent=5 // pred_check
        %p195 = pneg %p194
      $region30: #{tpu_custom_call.1} parent=5 // pred_check_branch
        %197 = sbr.rel (%p195) target = $region32
      $region31: #{tpu_custom_call.1} parent=5 // pred_region
        // Predicated region
        $region33: #{tpu_custom_call.1} parent=31 // pred_check
          %p198 = pneg %p40
        $region34: #{tpu_custom_call.1} parent=31 // pred_check_branch
          %200 = sbr.rel (%p198) target = $region36
        $region35: #{tpu_custom_call.1} parent=31 // pred_region
          %s201 = sand.u32 %s30, 1
          %s202 = scalar_lea.sflag [#allocation4], %s201
          %s203 = sand.u32 %s30, 1
          %s204 = smul.addr %s203, 128
          %s205 = scalar_lea.vmem [#allocation3], %s204
          %s206 = smul.u32 8, %s20
          %208 = vsyncadd %s202, 0
          %s209 = smul.addr %s206, 4
          %s210 = smul.addr %s209, 4
          %s211 = scalar_lea.hbm %s0, %s210
          %s212 = sshll.u32 %s211, 4
          %s213 = int_to_ptr.hbm [resolvable:$true] %s212
          %s214 = sshll.u32 %s205, 4
          %s215 = int_to_ptr.vmem [resolvable:$true] %s214
          %220 = dma.hbm_to_vmem [thread:$0]  %s213, 2048, %s215, %s202, 64, 64, 4
        $region36: #{tpu_custom_call.1} parent=31 // pred_fallthru
          _
      $region32: #{tpu_custom_call.1} parent=5 // pred_fallthru
        _
      %p221 = scmp.le.s32.totalorder 1, %s20
      %p222 = scmp.lt.s32.totalorder %s20, 3
      %p223 = pnand %p221, %p222
      %p224 = pneg %p223
      // Predicated region
      $region37: #{tpu_custom_call.1} parent=5 // pred_check
        _
      $region38: #{tpu_custom_call.1} parent=5 // pred_check_branch
        %226 = sbr.rel (%p223) target = $region40
      $region39: #{tpu_custom_call.1} parent=5 // pred_region
        %s227 = ssub.s32 %s20, 1
        %s228 = sand.u32 %s33, 1
        %s229 = scalar_lea.sflag [#allocation4], %s228
        %s230 = sand.u32 %s33, 1
        %s231 = smul.addr %s230, 128
        %s232 = scalar_lea.vmem [#allocation3], %s231
        // Predicated region
        $region41: #{tpu_custom_call.1} parent=39 // pred_check
          %p233 = pneg %p46
        $region42: #{tpu_custom_call.1} parent=39 // pred_check_branch
          %235 = sbr.rel (%p233) target = $region44
        $region43: #{tpu_custom_call.1} parent=39 // pred_region
          %237 = dma.done %s229, 2048
        $region44: #{tpu_custom_call.1} parent=39 // pred_fallthru
          _
        // Predicated region
        $region45: #{tpu_custom_call.1} parent=39 // pred_check
          %p238 = pneg %p67
        $region46: #{tpu_custom_call.1} parent=39 // pred_check_branch
          %240 = sbr.rel (%p238) target = $region48
        $region47: #{tpu_custom_call.1} parent=39 // pred_region
          %242 = dma.done [#allocation7], 1024
        $region48: #{tpu_custom_call.1} parent=39 // pred_fallthru
          _
        %s243 = sand.u32 %s33, 1
        %s244 = scalar_lea.sflag [#allocation4], %s243
        %s245 = sand.u32 %s33, 1
        %s246 = smul.addr %s245, 128
        %s247 = scalar_lea.vmem [#allocation3], %s246
        %p248 = pneg %p46
        %p249 = pneg %p43
        %p250 = pneg %p67
        %p251 = pneg %p64
        %p252 = pneg %p88
        %p253 = pneg %p85
        %p254 = pneg %p109
        %p255 = pneg %p106
        %p256 = pneg %p130
        %p257 = pneg %p127
        %p258 = pneg %p156
        %p259 = pneg %p153
        %s260 = sand.u32 %s143, 1
        %s261 = scalar_lea.sflag [#allocation5], %s260
        %s262 = sand.u32 %s143, 1
        %s263 = smul.addr %s262, 8
        %s264 = scalar_lea.vmem [#allocation8], %s263
        %s265 = smul.u32 8, %s25
        %v266 = vld [vmem:[%s232] sm:$0xf]
        %v267 = vld [vmem:[%s232 + $0x4] sm:$0xf]
        %v268 = vld [vmem:[%s232 + $0x8] sm:$0xf]
        %v269 = vld [vmem:[%s232 + $0xc] sm:$0xf]
        %v270 = vld [vmem:[%s232 + $0x10] sm:$0xf]
        %v271 = vld [vmem:[%s232 + $0x14] sm:$0xf]
        %v272 = vld [vmem:[%s232 + $0x18] sm:$0xf]
        %v273 = vld [vmem:[%s232 + $0x1c] sm:$0xf]
        %v274 = vld [vmem:[%s232 + $0x20] sm:$0xf]
        %v275 = vld [vmem:[%s232 + $0x24] sm:$0xf]
        %v276 = vld [vmem:[%s232 + $0x28] sm:$0xf]
        %v277 = vld [vmem:[%s232 + $0x2c] sm:$0xf]
        %v278 = vld [vmem:[%s232 + $0x30] sm:$0xf]
        %v279 = vld [vmem:[%s232 + $0x34] sm:$0xf]
        %v280 = vld [vmem:[%s232 + $0x38] sm:$0xf]
        %v281 = vld [vmem:[%s232 + $0x3c] sm:$0xf]
        %v282 = vld [vmem:[%s232 + $0x40] sm:$0xf]
        %v283 = vld [vmem:[%s232 + $0x44] sm:$0xf]
        %v284 = vld [vmem:[%s232 + $0x48] sm:$0xf]
        %v285 = vld [vmem:[%s232 + $0x4c] sm:$0xf]
        %v286 = vld [vmem:[%s232 + $0x50] sm:$0xf]
        %v287 = vld [vmem:[%s232 + $0x54] sm:$0xf]
        %v288 = vld [vmem:[%s232 + $0x58] sm:$0xf]
        %v289 = vld [vmem:[%s232 + $0x5c] sm:$0xf]
        %v290 = vld [vmem:[%s232 + $0x60] sm:$0xf]
        %v291 = vld [vmem:[%s232 + $0x64] sm:$0xf]
        %v292 = vld [vmem:[%s232 + $0x68] sm:$0xf]
        %v293 = vld [vmem:[%s232 + $0x6c] sm:$0xf]
        %v294 = vld [vmem:[%s232 + $0x70] sm:$0xf]
        %v295 = vld [vmem:[%s232 + $0x74] sm:$0xf]
        %v296 = vld [vmem:[%s232 + $0x78] sm:$0xf]
        %v297 = vld [vmem:[%s232 + $0x7c] sm:$0xf]
        %v298 = vld [vmem:[#allocation6] sm:$0xf]
        %v299 = vld [vmem:[#allocation6 + $0x4] sm:$0xf]
        %v300 = vld [vmem:[#allocation6 + $0x8] sm:$0xf]
        %v301 = vld [vmem:[#allocation6 + $0xc] sm:$0xf]
        %v302 = vld [vmem:[#allocation6 + $0x10] sm:$0xf]
        %v303 = vld [vmem:[#allocation6 + $0x14] sm:$0xf]
        %v304 = vld [vmem:[#allocation6 + $0x18] sm:$0xf]
        %v305 = vld [vmem:[#allocation6 + $0x1c] sm:$0xf]
        %v306 = vld [vmem:[#allocation6 + $0x20] sm:$0xf]
        %v307 = vld [vmem:[#allocation6 + $0x24] sm:$0xf]
        %v308 = vld [vmem:[#allocation6 + $0x28] sm:$0xf]
        %v309 = vld [vmem:[#allocation6 + $0x2c] sm:$0xf]
        %v310 = vld [vmem:[#allocation6 + $0x30] sm:$0xf]
        %v311 = vld [vmem:[#allocation6 + $0x34] sm:$0xf]
        %v312 = vld [vmem:[#allocation6 + $0x38] sm:$0xf]
        %v313 = vld [vmem:[#allocation6 + $0x3c] sm:$0xf]
        %v314 = vld [vmem:[%s2] sm:$0x1]
        %v316 = vperm.slane %v314, 0
        %v350 = vunpack.c.l.b16 %v266
        %v351 = vunpack.c.l.b16 %v267
        %v352 = vunpack.c.l.b16 %v268
        %v353 = vunpack.c.l.b16 %v269
        %v354 = vunpack.c.l.b16 %v270
        %v355 = vunpack.c.l.b16 %v271
        %v356 = vunpack.c.l.b16 %v272
        %v357 = vunpack.c.l.b16 %v273
        %v358 = vunpack.c.l.b16 %v274
        %v359 = vunpack.c.l.b16 %v275
        %v360 = vunpack.c.l.b16 %v276
        %v361 = vunpack.c.l.b16 %v277
        %v362 = vunpack.c.l.b16 %v278
        %v363 = vunpack.c.l.b16 %v279
        %v364 = vunpack.c.l.b16 %v280
        %v365 = vunpack.c.l.b16 %v281
        %v366 = vunpack.c.l.b16 %v282
        %v367 = vunpack.c.l.b16 %v283
        %v368 = vunpack.c.l.b16 %v284
        %v369 = vunpack.c.l.b16 %v285
        %v370 = vunpack.c.l.b16 %v286
        %v371 = vunpack.c.l.b16 %v287
        %v372 = vunpack.c.l.b16 %v288
        %v373 = vunpack.c.l.b16 %v289
        %v374 = vunpack.c.l.b16 %v290
        %v375 = vunpack.c.l.b16 %v291
        %v376 = vunpack.c.l.b16 %v292
        %v377 = vunpack.c.l.b16 %v293
        %v378 = vunpack.c.l.b16 %v294
        %v379 = vunpack.c.l.b16 %v295
        %v380 = vunpack.c.l.b16 %v296
        %v381 = vunpack.c.l.b16 %v297
        %v382 = vpack.c.b16 %v351, %v350
        %v383 = vpack.c.b16 %v353, %v352
        %v384 = vpack.c.b16 %v355, %v354
        %v385 = vpack.c.b16 %v357, %v356
        %v386 = vpack.c.b16 %v359, %v358
        %v387 = vpack.c.b16 %v361, %v360
        %v388 = vpack.c.b16 %v363, %v362
        %v389 = vpack.c.b16 %v365, %v364
        %v390 = vpack.c.b16 %v367, %v366
        %v391 = vpack.c.b16 %v369, %v368
        %v392 = vpack.c.b16 %v371, %v370
        %v393 = vpack.c.b16 %v373, %v372
        %v394 = vpack.c.b16 %v375, %v374
        %v395 = vpack.c.b16 %v377, %v376
        %v396 = vpack.c.b16 %v379, %v378
        %v397 = vpack.c.b16 %v381, %v380
        %v430 = vunpack.c.l.b16 %v298
        %v431 = vunpack.c.l.b16 %v299
        %v432 = vunpack.c.l.b16 %v300
        %v433 = vunpack.c.l.b16 %v301
        %v434 = vunpack.c.l.b16 %v302
        %v435 = vunpack.c.l.b16 %v303
        %v436 = vunpack.c.l.b16 %v304
        %v437 = vunpack.c.l.b16 %v305
        %v438 = vunpack.c.l.b16 %v306
        %v439 = vunpack.c.l.b16 %v307
        %v440 = vunpack.c.l.b16 %v308
        %v441 = vunpack.c.l.b16 %v309
        %v442 = vunpack.c.l.b16 %v310
        %v443 = vunpack.c.l.b16 %v311
        %v444 = vunpack.c.l.b16 %v312
        %v445 = vunpack.c.l.b16 %v313
        %v446 = vpack.c.b16 %v431, %v430
        %v447 = vpack.c.b16 %v433, %v432
        %v448 = vpack.c.b16 %v435, %v434
        %v449 = vpack.c.b16 %v437, %v436
        %v450 = vpack.c.b16 %v439, %v438
        %v451 = vpack.c.b16 %v441, %v440
        %v452 = vpack.c.b16 %v443, %v442
        %v453 = vpack.c.b16 %v445, %v444
        %462 = vmatpush.bf16.msra.mxu0 %v453
        %463 = vmatpush.bf16.msra.mxu0 %v452
        %464 = vmatpush.bf16.msra.mxu0 %v451
        %465 = vmatpush.bf16.msra.mxu0 %v450
        %466 = vmatpush.bf16.msra.mxu0 %v449
        %467 = vmatpush.bf16.msra.mxu0 %v448
        %468 = vmatpush.bf16.msra.mxu0 %v447
        %469 = vmatpush.bf16.msra.mxu0 %v446
        %470 = vmatmul.bf16.gmra.mxu0 %v382
        %v471 = vpop.f32.mrf.mxu0
        %v472 = vadd.f32 %v316, %v471
        %v473 = vpop.f32.mrf.mxu0
        %v474 = vadd.f32 %v316, %v473
        %475 = vmatmul.bf16.gmra.mxu0 %v383
        %v476 = vpop.f32.mrf.mxu0
        %v477 = vadd.f32 %v316, %v476
        %v478 = vpop.f32.mrf.mxu0
        %v479 = vadd.f32 %v316, %v478
        %480 = vmatmul.bf16.gmra.mxu0 %v384
        %v481 = vpop.f32.mrf.mxu0
        %v482 = vadd.f32 %v316, %v481
        %v483 = vpop.f32.mrf.mxu0
        %v484 = vadd.f32 %v316, %v483
        %485 = vmatmul.bf16.gmra.mxu0 %v385
        %v486 = vpop.f32.mrf.mxu0
        %v487 = vadd.f32 %v316, %v486
        %v488 = vpop.f32.mrf.mxu0
        %v489 = vadd.f32 %v316, %v488
        %490 = vmatmul.bf16.gmra.mxu0 %v386
        %v491 = vpop.f32.mrf.mxu0
        %v492 = vadd.f32 %v316, %v491
        %v493 = vpop.f32.mrf.mxu0
        %v494 = vadd.f32 %v316, %v493
        %495 = vmatmul.bf16.gmra.mxu0 %v387
        %v496 = vpop.f32.mrf.mxu0
        %v497 = vadd.f32 %v316, %v496
        %v498 = vpop.f32.mrf.mxu0
        %v499 = vadd.f32 %v316, %v498
        %500 = vmatmul.bf16.gmra.mxu0 %v388
        %v501 = vpop.f32.mrf.mxu0
        %v502 = vadd.f32 %v316, %v501
        %v503 = vpop.f32.mrf.mxu0
        %v504 = vadd.f32 %v316, %v503
        %505 = vmatmul.bf16.gmra.mxu0 %v389
        %v506 = vpop.f32.mrf.mxu0
        %v507 = vadd.f32 %v316, %v506
        %v508 = vpop.f32.mrf.mxu0
        %v509 = vadd.f32 %v316, %v508
        %510 = vmatmul.bf16.gmra.mxu0 %v390
        %v511 = vpop.f32.mrf.mxu0
        %v512 = vadd.f32 %v316, %v511
        %v513 = vpop.f32.mrf.mxu0
        %v514 = vadd.f32 %v316, %v513
        %515 = vmatmul.bf16.gmra.mxu0 %v391
        %v516 = vpop.f32.mrf.mxu0
        %v517 = vadd.f32 %v316, %v516
        %v518 = vpop.f32.mrf.mxu0
        %v519 = vadd.f32 %v316, %v518
        %520 = vmatmul.bf16.gmra.mxu0 %v392
        %v521 = vpop.f32.mrf.mxu0
        %v522 = vadd.f32 %v316, %v521
        %v523 = vpop.f32.mrf.mxu0
        %v524 = vadd.f32 %v316, %v523
        %525 = vmatmul.bf16.gmra.mxu0 %v393
        %v526 = vpop.f32.mrf.mxu0
        %v527 = vadd.f32 %v316, %v526
        %v528 = vpop.f32.mrf.mxu0
        %v529 = vadd.f32 %v316, %v528
        %530 = vmatmul.bf16.gmra.mxu0 %v394
        %v531 = vpop.f32.mrf.mxu0
        %v532 = vadd.f32 %v316, %v531
        %v533 = vpop.f32.mrf.mxu0
        %v534 = vadd.f32 %v316, %v533
        %535 = vmatmul.bf16.gmra.mxu0 %v395
        %v536 = vpop.f32.mrf.mxu0
        %v537 = vadd.f32 %v316, %v536
        %v538 = vpop.f32.mrf.mxu0
        %v539 = vadd.f32 %v316, %v538
        %540 = vmatmul.bf16.gmra.mxu0 %v396
        %v541 = vpop.f32.mrf.mxu0
        %v542 = vadd.f32 %v316, %v541
        %v543 = vpop.f32.mrf.mxu0
        %v544 = vadd.f32 %v316, %v543
        %545 = vmatmul.bf16.gmra.mxu0 %v397
        %v546 = vpop.f32.mrf.mxu0
        %v547 = vadd.f32 %v316, %v546
        %v548 = vpop.f32.mrf.mxu0
        %v549 = vadd.f32 %v316, %v548
        %550 = vdwg.mxu0
        %v551 = vmax.f32 %v472, 0.0
        %v552 = vmax.f32 %v474, 0.0
        %v553 = vmax.f32 %v477, 0.0
        %v554 = vmax.f32 %v479, 0.0
        %v555 = vmax.f32 %v482, 0.0
        %v556 = vmax.f32 %v484, 0.0
        %v557 = vmax.f32 %v487, 0.0
        %v558 = vmax.f32 %v489, 0.0
        %v559 = vmax.f32 %v492, 0.0
        %v560 = vmax.f32 %v494, 0.0
        %v561 = vmax.f32 %v497, 0.0
        %v562 = vmax.f32 %v499, 0.0
        %v563 = vmax.f32 %v502, 0.0
        %v564 = vmax.f32 %v504, 0.0
        %v565 = vmax.f32 %v507, 0.0
        %v566 = vmax.f32 %v509, 0.0
        %v567 = vmax.f32 %v512, 0.0
        %v568 = vmax.f32 %v514, 0.0
        %v569 = vmax.f32 %v517, 0.0
        %v570 = vmax.f32 %v519, 0.0
        %v571 = vmax.f32 %v522, 0.0
        %v572 = vmax.f32 %v524, 0.0
        %v573 = vmax.f32 %v527, 0.0
        %v574 = vmax.f32 %v529, 0.0
        %v575 = vmax.f32 %v532, 0.0
        %v576 = vmax.f32 %v534, 0.0
        %v577 = vmax.f32 %v537, 0.0
        %v578 = vmax.f32 %v539, 0.0
        %v579 = vmax.f32 %v542, 0.0
        %v580 = vmax.f32 %v544, 0.0
        %v581 = vmax.f32 %v547, 0.0
        %v582 = vmax.f32 %v549, 0.0
        %v583 = vld [vmem:[%s3] sm:$0x1]
        %v585 = vperm.slane %v583, 0
        %v587 = vmul.f32 %v551, %v585
        %v588 = vmul.f32 %v552, %v585
        %v589 = vmul.f32 %v553, %v585
        %v590 = vmul.f32 %v554, %v585
        %v591 = vmul.f32 %v555, %v585
        %v592 = vmul.f32 %v556, %v585
        %v593 = vmul.f32 %v557, %v585
        %v594 = vmul.f32 %v558, %v585
        %v595 = vmul.f32 %v559, %v585
        %v596 = vmul.f32 %v560, %v585
        %v597 = vmul.f32 %v561, %v585
        %v598 = vmul.f32 %v562, %v585
        %v599 = vmul.f32 %v563, %v585
        %v600 = vmul.f32 %v564, %v585
        %v601 = vmul.f32 %v565, %v585
        %v602 = vmul.f32 %v566, %v585
        %v603 = vmul.f32 %v567, %v585
        %v604 = vmul.f32 %v568, %v585
        %v605 = vmul.f32 %v569, %v585
        %v606 = vmul.f32 %v570, %v585
        %v607 = vmul.f32 %v571, %v585
        %v608 = vmul.f32 %v572, %v585
        %v609 = vmul.f32 %v573, %v585
        %v610 = vmul.f32 %v574, %v585
        %v611 = vmul.f32 %v575, %v585
        %v612 = vmul.f32 %v576, %v585
        %v613 = vmul.f32 %v577, %v585
        %v614 = vmul.f32 %v578, %v585
        %v615 = vmul.f32 %v579, %v585
        %v616 = vmul.f32 %v580, %v585
        %v617 = vmul.f32 %v581, %v585
        %v618 = vmul.f32 %v582, %v585
        %619 = vadd.xlane.f32.xlu0 %v587
        %v620 = vpop.xlane.xlu0 %619
        %621 = vadd.xlane.f32.xlu0 %v588
        %v622 = vpop.xlane.xlu0 %621
        %623 = vadd.xlane.f32.xlu0 %v589
        %v624 = vpop.xlane.xlu0 %623
        %625 = vadd.xlane.f32.xlu0 %v590
        %v626 = vpop.xlane.xlu0 %625
        %627 = vadd.xlane.f32.xlu0 %v591
        %v628 = vpop.xlane.xlu0 %627
        %629 = vadd.xlane.f32.xlu0 %v592
        %v630 = vpop.xlane.xlu0 %629
        %631 = vadd.xlane.f32.xlu0 %v593
        %v632 = vpop.xlane.xlu0 %631
        %633 = vadd.xlane.f32.xlu0 %v594
        %v634 = vpop.xlane.xlu0 %633
        %635 = vadd.xlane.f32.xlu0 %v595
        %v636 = vpop.xlane.xlu0 %635
        %637 = vadd.xlane.f32.xlu0 %v596
        %v638 = vpop.xlane.xlu0 %637
        %639 = vadd.xlane.f32.xlu0 %v597
        %v640 = vpop.xlane.xlu0 %639
        %641 = vadd.xlane.f32.xlu0 %v598
        %v642 = vpop.xlane.xlu0 %641
        %643 = vadd.xlane.f32.xlu0 %v599
        %v644 = vpop.xlane.xlu0 %643
        %645 = vadd.xlane.f32.xlu0 %v600
        %v646 = vpop.xlane.xlu0 %645
        %647 = vadd.xlane.f32.xlu0 %v601
        %v648 = vpop.xlane.xlu0 %647
        %649 = vadd.xlane.f32.xlu0 %v602
        %v650 = vpop.xlane.xlu0 %649
        %651 = vadd.xlane.f32.xlu0 %v603
        %v652 = vpop.xlane.xlu0 %651
        %653 = vadd.xlane.f32.xlu0 %v604
        %v654 = vpop.xlane.xlu0 %653
        %655 = vadd.xlane.f32.xlu0 %v605
        %v656 = vpop.xlane.xlu0 %655
        %657 = vadd.xlane.f32.xlu0 %v606
        %v658 = vpop.xlane.xlu0 %657
        %659 = vadd.xlane.f32.xlu0 %v607
        %v660 = vpop.xlane.xlu0 %659
        %661 = vadd.xlane.f32.xlu0 %v608
        %v662 = vpop.xlane.xlu0 %661
        %663 = vadd.xlane.f32.xlu0 %v609
        %v664 = vpop.xlane.xlu0 %663
        %665 = vadd.xlane.f32.xlu0 %v610
        %v666 = vpop.xlane.xlu0 %665
        %667 = vadd.xlane.f32.xlu0 %v611
        %v668 = vpop.xlane.xlu0 %667
        %669 = vadd.xlane.f32.xlu0 %v612
        %v670 = vpop.xlane.xlu0 %669
        %671 = vadd.xlane.f32.xlu0 %v613
        %v672 = vpop.xlane.xlu0 %671
        %673 = vadd.xlane.f32.xlu0 %v614
        %v674 = vpop.xlane.xlu0 %673
        %675 = vadd.xlane.f32.xlu0 %v615
        %v676 = vpop.xlane.xlu0 %675
        %677 = vadd.xlane.f32.xlu0 %v616
        %v678 = vpop.xlane.xlu0 %677
        %679 = vadd.xlane.f32.xlu0 %v617
        %v680 = vpop.xlane.xlu0 %679
        %681 = vadd.xlane.f32.xlu0 %v618
        %v682 = vpop.xlane.xlu0 %681
        %v683 = vld [vmem:[#allocation2] sm:$0x1]
        %v685 = vperm.slane %v683, 0
        %686 = vset.pattern.permute.xlu0 0
        %687 = vperm.xlu0 %686, %v685
        %v688 = vpop.permute.xlu0 %687
        %v690 = vadd.f32 %v620, %v688
        %v691 = vadd.f32 %v622, %v688
        %v692 = vadd.f32 %v624, %v688
        %v693 = vadd.f32 %v626, %v688
        %v694 = vadd.f32 %v628, %v688
        %v695 = vadd.f32 %v630, %v688
        %v696 = vadd.f32 %v632, %v688
        %v697 = vadd.f32 %v634, %v688
        %v698 = vadd.f32 %v636, %v688
        %v699 = vadd.f32 %v638, %v688
        %v700 = vadd.f32 %v640, %v688
        %v701 = vadd.f32 %v642, %v688
        %v702 = vadd.f32 %v644, %v688
        %v703 = vadd.f32 %v646, %v688
        %v704 = vadd.f32 %v648, %v688
        %v705 = vadd.f32 %v650, %v688
        %v706 = vadd.f32 %v652, %v688
        %v707 = vadd.f32 %v654, %v688
        %v708 = vadd.f32 %v656, %v688
        %v709 = vadd.f32 %v658, %v688
        %v710 = vadd.f32 %v660, %v688
        %v711 = vadd.f32 %v662, %v688
        %v712 = vadd.f32 %v664, %v688
        %v713 = vadd.f32 %v666, %v688
        %v714 = vadd.f32 %v668, %v688
        %v715 = vadd.f32 %v670, %v688
        %v716 = vadd.f32 %v672, %v688
        %v717 = vadd.f32 %v674, %v688
        %v718 = vadd.f32 %v676, %v688
        %v719 = vadd.f32 %v678, %v688
        %v720 = vadd.f32 %v680, %v688
        %v721 = vadd.f32 %v682, %v688
        %v754 = vlaneseq
        %v755 = vand.u32 %v754, 127
        %v756 = vperm.slane %v690, %v755
        %v757 = vadd.s32 %v755, 4294967288
        %v758 = vperm.slane %v691, %v757
        %vm759 = vcmask 130112
        %v760 = vsel %vm759, %v758, %v756
        %v761 = vadd.s32 %v755, 4294967280
        %v762 = vperm.slane %v692, %v761
        %vm763 = vcmask 195712
        %v764 = vsel %vm763, %v762, %v760
        %v765 = vadd.s32 %v755, 4294967272
        %v766 = vperm.slane %v693, %v765
        %vm767 = vcmask 261312
        %v768 = vsel %vm767, %v766, %v764
        %v769 = vperm.slane %v694, %v755
        %v770 = vperm.slane %v695, %v757
        %v771 = vsel %vm759, %v770, %v769
        %v772 = vperm.slane %v696, %v761
        %v773 = vsel %vm763, %v772, %v771
        %v774 = vperm.slane %v697, %v765
        %v775 = vsel %vm767, %v774, %v773
        %v776 = vperm.slane %v698, %v755
        %v777 = vperm.slane %v699, %v757
        %v778 = vsel %vm759, %v777, %v776
        %v779 = vperm.slane %v700, %v761
        %v780 = vsel %vm763, %v779, %v778
        %v781 = vperm.slane %v701, %v765
        %v782 = vsel %vm767, %v781, %v780
        %v783 = vperm.slane %v702, %v755
        %v784 = vperm.slane %v703, %v757
        %v785 = vsel %vm759, %v784, %v783
        %v786 = vperm.slane %v704, %v761
        %v787 = vsel %vm763, %v786, %v785
        %v788 = vperm.slane %v705, %v765
        %v789 = vsel %vm767, %v788, %v787
        %v790 = vperm.slane %v706, %v755
        %v791 = vperm.slane %v707, %v757
        %v792 = vsel %vm759, %v791, %v790
        %v793 = vperm.slane %v708, %v761
        %v794 = vsel %vm763, %v793, %v792
        %v795 = vperm.slane %v709, %v765
        %v796 = vsel %vm767, %v795, %v794
        %v797 = vperm.slane %v710, %v755
        %v798 = vperm.slane %v711, %v757
        %v799 = vsel %vm759, %v798, %v797
        %v800 = vperm.slane %v712, %v761
        %v801 = vsel %vm763, %v800, %v799
        %v802 = vperm.slane %v713, %v765
        %v803 = vsel %vm767, %v802, %v801
        %v804 = vperm.slane %v714, %v755
        %v805 = vperm.slane %v715, %v757
        %v806 = vsel %vm759, %v805, %v804
        %v807 = vperm.slane %v716, %v761
        %v808 = vsel %vm763, %v807, %v806
        %v809 = vperm.slane %v717, %v765
        %v810 = vsel %vm767, %v809, %v808
        %v811 = vperm.slane %v718, %v755
        %v812 = vperm.slane %v719, %v757
        %v813 = vsel %vm759, %v812, %v811
        %v814 = vperm.slane %v720, %v761
        %v815 = vsel %vm763, %v814, %v813
        %v816 = vperm.slane %v721, %v765
        %v817 = vsel %vm767, %v816, %v815
        %vm818 = vcmask 1041409
        %v819 = vsel %vm818, %v775, %v768
        %vm820 = vcmask 1042434
        %v821 = vsel %vm820, %v782, %v819
        %vm822 = vcmask 1043459
        %v823 = vsel %vm822, %v789, %v821
        %vm824 = vcmask 1044484
        %v825 = vsel %vm824, %v796, %v823
        %vm826 = vcmask 1045509
        %v827 = vsel %vm826, %v803, %v825
        %vm828 = vcmask 1046534
        %v829 = vsel %vm828, %v810, %v827
        %vm830 = vcmask 1047559
        %v831 = vsel %vm830, %v817, %v829
        %vm833 = vcmask 261120
        %v834 = vsel %vm833, %v831, -inf
        %835 = vmax.xlane.f32.xlu0 %v834
        %v836 = vpop.xlane.xlu0 %835
        %v838 = vperm.slane %v836, 0
        %v839 = vperm.slane %v836, 1
        %v840 = vperm.slane %v836, 2
        %v841 = vperm.slane %v836, 3
        %v842 = vperm.slane %v836, 4
        %v843 = vperm.slane %v836, 5
        %v844 = vperm.slane %v836, 6
        %v845 = vperm.slane %v836, 7
        %v854 = vsub.f32 %v690, %v838
        %v855 = vsub.f32 %v691, %v838
        %v856 = vsub.f32 %v692, %v838
        %v857 = vsub.f32 %v693, %v838
        %v858 = vsub.f32 %v694, %v839
        %v859 = vsub.f32 %v695, %v839
        %v860 = vsub.f32 %v696, %v839
        %v861 = vsub.f32 %v697, %v839
        %v862 = vsub.f32 %v698, %v840
        %v863 = vsub.f32 %v699, %v840
        %v864 = vsub.f32 %v700, %v840
        %v865 = vsub.f32 %v701, %v840
        %v866 = vsub.f32 %v702, %v841
        %v867 = vsub.f32 %v703, %v841
        %v868 = vsub.f32 %v704, %v841
        %v869 = vsub.f32 %v705, %v841
        %v870 = vsub.f32 %v706, %v842
        %v871 = vsub.f32 %v707, %v842
        %v872 = vsub.f32 %v708, %v842
        %v873 = vsub.f32 %v709, %v842
        %v874 = vsub.f32 %v710, %v843
        %v875 = vsub.f32 %v711, %v843
        %v876 = vsub.f32 %v712, %v843
        %v877 = vsub.f32 %v713, %v843
        %v878 = vsub.f32 %v714, %v844
        %v879 = vsub.f32 %v715, %v844
        %v880 = vsub.f32 %v716, %v844
        %v881 = vsub.f32 %v717, %v844
        %v882 = vsub.f32 %v718, %v845
        %v883 = vsub.f32 %v719, %v845
        %v884 = vsub.f32 %v720, %v845
        %v885 = vsub.f32 %v721, %v845
        %v886 = vmul.f32 %v854, 1.442695
        %v887 = vpow.pop %v886
        %v888 = vmul.f32 %v855, 1.442695
        %v889 = vpow.pop %v888
        %v890 = vmul.f32 %v856, 1.442695
        %v891 = vpow.pop %v890
        %v892 = vmul.f32 %v857, 1.442695
        %v893 = vpow.pop %v892
        %v894 = vmul.f32 %v858, 1.442695
        %v895 = vpow.pop %v894
        %v896 = vmul.f32 %v859, 1.442695
        %v897 = vpow.pop %v896
        %v898 = vmul.f32 %v860, 1.442695
        %v899 = vpow.pop %v898
        %v900 = vmul.f32 %v861, 1.442695
        %v901 = vpow.pop %v900
        %v902 = vmul.f32 %v862, 1.442695
        %v903 = vpow.pop %v902
        %v904 = vmul.f32 %v863, 1.442695
        %v905 = vpow.pop %v904
        %v906 = vmul.f32 %v864, 1.442695
        %v907 = vpow.pop %v906
        %v908 = vmul.f32 %v865, 1.442695
        %v909 = vpow.pop %v908
        %v910 = vmul.f32 %v866, 1.442695
        %v911 = vpow.pop %v910
        %v912 = vmul.f32 %v867, 1.442695
        %v913 = vpow.pop %v912
        %v914 = vmul.f32 %v868, 1.442695
        %v915 = vpow.pop %v914
        %v916 = vmul.f32 %v869, 1.442695
        %v917 = vpow.pop %v916
        %v918 = vmul.f32 %v870, 1.442695
        %v919 = vpow.pop %v918
        %v920 = vmul.f32 %v871, 1.442695
        %v921 = vpow.pop %v920
        %v922 = vmul.f32 %v872, 1.442695
        %v923 = vpow.pop %v922
        %v924 = vmul.f32 %v873, 1.442695
        %v925 = vpow.pop %v924
        %v926 = vmul.f32 %v874, 1.442695
        %v927 = vpow.pop %v926
        %v928 = vmul.f32 %v875, 1.442695
        %v929 = vpow.pop %v928
        %v930 = vmul.f32 %v876, 1.442695
        %v931 = vpow.pop %v930
        %v932 = vmul.f32 %v877, 1.442695
        %v933 = vpow.pop %v932
        %v934 = vmul.f32 %v878, 1.442695
        %v935 = vpow.pop %v934
        %v936 = vmul.f32 %v879, 1.442695
        %v937 = vpow.pop %v936
        %v938 = vmul.f32 %v880, 1.442695
        %v939 = vpow.pop %v938
        %v940 = vmul.f32 %v881, 1.442695
        %v941 = vpow.pop %v940
        %v942 = vmul.f32 %v882, 1.442695
        %v943 = vpow.pop %v942
        %v944 = vmul.f32 %v883, 1.442695
        %v945 = vpow.pop %v944
        %v946 = vmul.f32 %v884, 1.442695
        %v947 = vpow.pop %v946
        %v948 = vmul.f32 %v885, 1.442695
        %v949 = vpow.pop %v948
        %982 = vset.pattern.permute.xlu0 0
        %983 = vperm.xlu0 %982, %v887
        %v984 = vpop.permute.xlu0 %983
        %985 = vset.pattern.permute.xlu0 0
        %986 = vperm.xlu0 %985, %v889
        %v987 = vpop.permute.xlu0 %986
        %988 = vset.pattern.permute.xlu0 0
        %989 = vperm.xlu0 %988, %v891
        %v990 = vpop.permute.xlu0 %989
        %991 = vset.pattern.permute.xlu0 0
        %992 = vperm.xlu0 %991, %v893
        %v993 = vpop.permute.xlu0 %992
        %994 = vset.pattern.permute.xlu0 0
        %995 = vperm.xlu0 %994, %v895
        %v996 = vpop.permute.xlu0 %995
        %997 = vset.pattern.permute.xlu0 0
        %998 = vperm.xlu0 %997, %v897
        %v999 = vpop.permute.xlu0 %998
        %1000 = vset.pattern.permute.xlu0 0
        %1001 = vperm.xlu0 %1000, %v899
        %v1002 = vpop.permute.xlu0 %1001
        %1003 = vset.pattern.permute.xlu0 0
        %1004 = vperm.xlu0 %1003, %v901
        %v1005 = vpop.permute.xlu0 %1004
        %1006 = vset.pattern.permute.xlu0 0
        %1007 = vperm.xlu0 %1006, %v903
        %v1008 = vpop.permute.xlu0 %1007
        %1009 = vset.pattern.permute.xlu0 0
        %1010 = vperm.xlu0 %1009, %v905
        %v1011 = vpop.permute.xlu0 %1010
        %1012 = vset.pattern.permute.xlu0 0
        %1013 = vperm.xlu0 %1012, %v907
        %v1014 = vpop.permute.xlu0 %1013
        %1015 = vset.pattern.permute.xlu0 0
        %1016 = vperm.xlu0 %1015, %v909
        %v1017 = vpop.permute.xlu0 %1016
        %1018 = vset.pattern.permute.xlu0 0
        %1019 = vperm.xlu0 %1018, %v911
        %v1020 = vpop.permute.xlu0 %1019
        %1021 = vset.pattern.permute.xlu0 0
        %1022 = vperm.xlu0 %1021, %v913
        %v1023 = vpop.permute.xlu0 %1022
        %1024 = vset.pattern.permute.xlu0 0
        %1025 = vperm.xlu0 %1024, %v915
        %v1026 = vpop.permute.xlu0 %1025
        %1027 = vset.pattern.permute.xlu0 0
        %1028 = vperm.xlu0 %1027, %v917
        %v1029 = vpop.permute.xlu0 %1028
        %1030 = vset.pattern.permute.xlu0 0
        %1031 = vperm.xlu0 %1030, %v919
        %v1032 = vpop.permute.xlu0 %1031
        %1033 = vset.pattern.permute.xlu0 0
        %1034 = vperm.xlu0 %1033, %v921
        %v1035 = vpop.permute.xlu0 %1034
        %1036 = vset.pattern.permute.xlu0 0
        %1037 = vperm.xlu0 %1036, %v923
        %v1038 = vpop.permute.xlu0 %1037
        %1039 = vset.pattern.permute.xlu0 0
        %1040 = vperm.xlu0 %1039, %v925
        %v1041 = vpop.permute.xlu0 %1040
        %1042 = vset.pattern.permute.xlu0 0
        %1043 = vperm.xlu0 %1042, %v927
        %v1044 = vpop.permute.xlu0 %1043
        %1045 = vset.pattern.permute.xlu0 0
        %1046 = vperm.xlu0 %1045, %v929
        %v1047 = vpop.permute.xlu0 %1046
        %1048 = vset.pattern.permute.xlu0 0
        %1049 = vperm.xlu0 %1048, %v931
        %v1050 = vpop.permute.xlu0 %1049
        %1051 = vset.pattern.permute.xlu0 0
        %1052 = vperm.xlu0 %1051, %v933
        %v1053 = vpop.permute.xlu0 %1052
        %1054 = vset.pattern.permute.xlu0 0
        %1055 = vperm.xlu0 %1054, %v935
        %v1056 = vpop.permute.xlu0 %1055
        %1057 = vset.pattern.permute.xlu0 0
        %1058 = vperm.xlu0 %1057, %v937
        %v1059 = vpop.permute.xlu0 %1058
        %1060 = vset.pattern.permute.xlu0 0
        %1061 = vperm.xlu0 %1060, %v939
        %v1062 = vpop.permute.xlu0 %1061
        %1063 = vset.pattern.permute.xlu0 0
        %1064 = vperm.xlu0 %1063, %v941
        %v1065 = vpop.permute.xlu0 %1064
        %1066 = vset.pattern.permute.xlu0 0
        %1067 = vperm.xlu0 %1066, %v943
        %v1068 = vpop.permute.xlu0 %1067
        %1069 = vset.pattern.permute.xlu0 0
        %1070 = vperm.xlu0 %1069, %v945
        %v1071 = vpop.permute.xlu0 %1070
        %1072 = vset.pattern.permute.xlu0 0
        %1073 = vperm.xlu0 %1072, %v947
        %v1074 = vpop.permute.xlu0 %1073
        %1075 = vset.pattern.permute.xlu0 0
        %1076 = vperm.xlu0 %1075, %v949
        %v1077 = vpop.permute.xlu0 %1076
        %v1078 = vperm.slane %v984, %v755
        %v1079 = vperm.slane %v987, %v757
        %v1080 = vsel %vm759, %v1079, %v1078
        %v1081 = vperm.slane %v990, %v761
        %v1082 = vsel %vm763, %v1081, %v1080
        %v1083 = vperm.slane %v993, %v765
        %v1084 = vsel %vm767, %v1083, %v1082
        %v1085 = vperm.slane %v996, %v755
        %v1086 = vperm.slane %v999, %v757
        %v1087 = vsel %vm759, %v1086, %v1085
        %v1088 = vperm.slane %v1002, %v761
        %v1089 = vsel %vm763, %v1088, %v1087
        %v1090 = vperm.slane %v1005, %v765
        %v1091 = vsel %vm767, %v1090, %v1089
        %v1092 = vperm.slane %v1008, %v755
        %v1093 = vperm.slane %v1011, %v757
        %v1094 = vsel %vm759, %v1093, %v1092
        %v1095 = vperm.slane %v1014, %v761
        %v1096 = vsel %vm763, %v1095, %v1094
        %v1097 = vperm.slane %v1017, %v765
        %v1098 = vsel %vm767, %v1097, %v1096
        %v1099 = vperm.slane %v1020, %v755
        %v1100 = vperm.slane %v1023, %v757
        %v1101 = vsel %vm759, %v1100, %v1099
        %v1102 = vperm.slane %v1026, %v761
        %v1103 = vsel %vm763, %v1102, %v1101
        %v1104 = vperm.slane %v1029, %v765
        %v1105 = vsel %vm767, %v1104, %v1103
        %v1106 = vperm.slane %v1032, %v755
        %v1107 = vperm.slane %v1035, %v757
        %v1108 = vsel %vm759, %v1107, %v1106
        %v1109 = vperm.slane %v1038, %v761
        %v1110 = vsel %vm763, %v1109, %v1108
        %v1111 = vperm.slane %v1041, %v765
        %v1112 = vsel %vm767, %v1111, %v1110
        %v1113 = vperm.slane %v1044, %v755
        %v1114 = vperm.slane %v1047, %v757
        %v1115 = vsel %vm759, %v1114, %v1113
        %v1116 = vperm.slane %v1050, %v761
        %v1117 = vsel %vm763, %v1116, %v1115
        %v1118 = vperm.slane %v1053, %v765
        %v1119 = vsel %vm767, %v1118, %v1117
        %v1120 = vperm.slane %v1056, %v755
        %v1121 = vperm.slane %v1059, %v757
        %v1122 = vsel %vm759, %v1121, %v1120
        %v1123 = vperm.slane %v1062, %v761
        %v1124 = vsel %vm763, %v1123, %v1122
        %v1125 = vperm.slane %v1065, %v765
        %v1126 = vsel %vm767, %v1125, %v1124
        %v1127 = vperm.slane %v1068, %v755
        %v1128 = vperm.slane %v1071, %v757
        %v1129 = vsel %vm759, %v1128, %v1127
        %v1130 = vperm.slane %v1074, %v761
        %v1131 = vsel %vm763, %v1130, %v1129
        %v1132 = vperm.slane %v1077, %v765
        %v1133 = vsel %vm767, %v1132, %v1131
        %v1134 = vsel %vm818, %v1091, %v1084
        %v1135 = vsel %vm820, %v1098, %v1134
        %v1136 = vsel %vm822, %v1105, %v1135
        %v1137 = vsel %vm824, %v1112, %v1136
        %v1138 = vsel %vm826, %v1119, %v1137
        %v1139 = vsel %vm828, %v1126, %v1138
        %v1140 = vsel %vm830, %v1133, %v1139
        %v1142 = vsel %vm833, %v1140, 0.0
        %1143 = vadd.xlane.f32.xlu0 %v1142
        %v1144 = vpop.xlane.xlu0 %1143
        %v1145 = vrcp.pop %v1144
        %v1147 = vperm.slane %v1145, 0
        %v1148 = vperm.slane %v1145, 1
        %v1149 = vperm.slane %v1145, 2
        %v1150 = vperm.slane %v1145, 3
        %v1151 = vperm.slane %v1145, 4
        %v1152 = vperm.slane %v1145, 5
        %v1153 = vperm.slane %v1145, 6
        %v1154 = vperm.slane %v1145, 7
        %v1163 = vmul.f32 %v887, %v1147
        %v1164 = vmul.f32 %v889, %v1147
        %v1165 = vmul.f32 %v891, %v1147
        %v1166 = vmul.f32 %v893, %v1147
        %v1167 = vmul.f32 %v895, %v1148
        %v1168 = vmul.f32 %v897, %v1148
        %v1169 = vmul.f32 %v899, %v1148
        %v1170 = vmul.f32 %v901, %v1148
        %v1171 = vmul.f32 %v903, %v1149
        %v1172 = vmul.f32 %v905, %v1149
        %v1173 = vmul.f32 %v907, %v1149
        %v1174 = vmul.f32 %v909, %v1149
        %v1175 = vmul.f32 %v911, %v1150
        %v1176 = vmul.f32 %v913, %v1150
        %v1177 = vmul.f32 %v915, %v1150
        %v1178 = vmul.f32 %v917, %v1150
        %v1179 = vmul.f32 %v919, %v1151
        %v1180 = vmul.f32 %v921, %v1151
        %v1181 = vmul.f32 %v923, %v1151
        %v1182 = vmul.f32 %v925, %v1151
        %v1183 = vmul.f32 %v927, %v1152
        %v1184 = vmul.f32 %v929, %v1152
        %v1185 = vmul.f32 %v931, %v1152
        %v1186 = vmul.f32 %v933, %v1152
        %v1187 = vmul.f32 %v935, %v1153
        %v1188 = vmul.f32 %v937, %v1153
        %v1189 = vmul.f32 %v939, %v1153
        %v1190 = vmul.f32 %v941, %v1153
        %v1191 = vmul.f32 %v943, %v1154
        %v1192 = vmul.f32 %v945, %v1154
        %v1193 = vmul.f32 %v947, %v1154
        %v1194 = vmul.f32 %v949, %v1154
        %v1195 = vunpack.c.l.bf16 %v266
        %v1196 = vunpack.c.l.bf16 %v267
        %v1197 = vunpack.c.l.bf16 %v268
        %v1198 = vunpack.c.l.bf16 %v269
        %v1199 = vunpack.c.l.bf16 %v270
        %v1200 = vunpack.c.l.bf16 %v271
        %v1201 = vunpack.c.l.bf16 %v272
        %v1202 = vunpack.c.l.bf16 %v273
        %v1203 = vunpack.c.l.bf16 %v274
        %v1204 = vunpack.c.l.bf16 %v275
        %v1205 = vunpack.c.l.bf16 %v276
        %v1206 = vunpack.c.l.bf16 %v277
        %v1207 = vunpack.c.l.bf16 %v278
        %v1208 = vunpack.c.l.bf16 %v279
        %v1209 = vunpack.c.l.bf16 %v280
        %v1210 = vunpack.c.l.bf16 %v281
        %v1211 = vunpack.c.l.bf16 %v282
        %v1212 = vunpack.c.l.bf16 %v283
        %v1213 = vunpack.c.l.bf16 %v284
        %v1214 = vunpack.c.l.bf16 %v285
        %v1215 = vunpack.c.l.bf16 %v286
        %v1216 = vunpack.c.l.bf16 %v287
        %v1217 = vunpack.c.l.bf16 %v288
        %v1218 = vunpack.c.l.bf16 %v289
        %v1219 = vunpack.c.l.bf16 %v290
        %v1220 = vunpack.c.l.bf16 %v291
        %v1221 = vunpack.c.l.bf16 %v292
        %v1222 = vunpack.c.l.bf16 %v293
        %v1223 = vunpack.c.l.bf16 %v294
        %v1224 = vunpack.c.l.bf16 %v295
        %v1225 = vunpack.c.l.bf16 %v296
        %v1226 = vunpack.c.l.bf16 %v297
        %1228 = vset.pattern.permute.xlu0 0
        %1229 = vperm.xlu0 %1228, %v1163
        %v1230 = vpop.permute.xlu0 %1229
        %1233 = vset.pattern.permute.xlu0 0
        %1234 = vperm.xlu0 %1233, %v1164
        %v1235 = vpop.permute.xlu0 %1234
        %1238 = vset.pattern.permute.xlu0 0
        %1239 = vperm.xlu0 %1238, %v1165
        %v1240 = vpop.permute.xlu0 %1239
        %1243 = vset.pattern.permute.xlu0 0
        %1244 = vperm.xlu0 %1243, %v1166
        %v1245 = vpop.permute.xlu0 %1244
        %1248 = vset.pattern.permute.xlu0 0
        %1249 = vperm.xlu0 %1248, %v1167
        %v1250 = vpop.permute.xlu0 %1249
        %1253 = vset.pattern.permute.xlu0 0
        %1254 = vperm.xlu0 %1253, %v1168
        %v1255 = vpop.permute.xlu0 %1254
        %1258 = vset.pattern.permute.xlu0 0
        %1259 = vperm.xlu0 %1258, %v1169
        %v1260 = vpop.permute.xlu0 %1259
        %1263 = vset.pattern.permute.xlu0 0
        %1264 = vperm.xlu0 %1263, %v1170
        %v1265 = vpop.permute.xlu0 %1264
        %1268 = vset.pattern.permute.xlu0 0
        %1269 = vperm.xlu0 %1268, %v1171
        %v1270 = vpop.permute.xlu0 %1269
        %1273 = vset.pattern.permute.xlu0 0
        %1274 = vperm.xlu0 %1273, %v1172
        %v1275 = vpop.permute.xlu0 %1274
        %1278 = vset.pattern.permute.xlu0 0
        %1279 = vperm.xlu0 %1278, %v1173
        %v1280 = vpop.permute.xlu0 %1279
        %1283 = vset.pattern.permute.xlu0 0
        %1284 = vperm.xlu0 %1283, %v1174
        %v1285 = vpop.permute.xlu0 %1284
        %1288 = vset.pattern.permute.xlu0 0
        %1289 = vperm.xlu0 %1288, %v1175
        %v1290 = vpop.permute.xlu0 %1289
        %1293 = vset.pattern.permute.xlu0 0
        %1294 = vperm.xlu0 %1293, %v1176
        %v1295 = vpop.permute.xlu0 %1294
        %1298 = vset.pattern.permute.xlu0 0
        %1299 = vperm.xlu0 %1298, %v1177
        %v1300 = vpop.permute.xlu0 %1299
        %1303 = vset.pattern.permute.xlu0 0
        %1304 = vperm.xlu0 %1303, %v1178
        %v1305 = vpop.permute.xlu0 %1304
        %1308 = vset.pattern.permute.xlu0 0
        %1309 = vperm.xlu0 %1308, %v1179
        %v1310 = vpop.permute.xlu0 %1309
        %1313 = vset.pattern.permute.xlu0 0
        %1314 = vperm.xlu0 %1313, %v1180
        %v1315 = vpop.permute.xlu0 %1314
        %1318 = vset.pattern.permute.xlu0 0
        %1319 = vperm.xlu0 %1318, %v1181
        %v1320 = vpop.permute.xlu0 %1319
        %1323 = vset.pattern.permute.xlu0 0
        %1324 = vperm.xlu0 %1323, %v1182
        %v1325 = vpop.permute.xlu0 %1324
        %1328 = vset.pattern.permute.xlu0 0
        %1329 = vperm.xlu0 %1328, %v1183
        %v1330 = vpop.permute.xlu0 %1329
        %1333 = vset.pattern.permute.xlu0 0
        %1334 = vperm.xlu0 %1333, %v1184
        %v1335 = vpop.permute.xlu0 %1334
        %1338 = vset.pattern.permute.xlu0 0
        %1339 = vperm.xlu0 %1338, %v1185
        %v1340 = vpop.permute.xlu0 %1339
        %1343 = vset.pattern.permute.xlu0 0
        %1344 = vperm.xlu0 %1343, %v1186
        %v1345 = vpop.permute.xlu0 %1344
        %1348 = vset.pattern.permute.xlu0 0
        %1349 = vperm.xlu0 %1348, %v1187
        %v1350 = vpop.permute.xlu0 %1349
        %1353 = vset.pattern.permute.xlu0 0
        %1354 = vperm.xlu0 %1353, %v1188
        %v1355 = vpop.permute.xlu0 %1354
        %1358 = vset.pattern.permute.xlu0 0
        %1359 = vperm.xlu0 %1358, %v1189
        %v1360 = vpop.permute.xlu0 %1359
        %1363 = vset.pattern.permute.xlu0 0
        %1364 = vperm.xlu0 %1363, %v1190
        %v1365 = vpop.permute.xlu0 %1364
        %1368 = vset.pattern.permute.xlu0 0
        %1369 = vperm.xlu0 %1368, %v1191
        %v1370 = vpop.permute.xlu0 %1369
        %1373 = vset.pattern.permute.xlu0 0
        %1374 = vperm.xlu0 %1373, %v1192
        %v1375 = vpop.permute.xlu0 %1374
        %1378 = vset.pattern.permute.xlu0 0
        %1379 = vperm.xlu0 %1378, %v1193
        %v1380 = vpop.permute.xlu0 %1379
        %1383 = vset.pattern.permute.xlu0 0
        %1384 = vperm.xlu0 %1383, %v1194
        %v1385 = vpop.permute.xlu0 %1384
        %v1387 = vmul.f32 %v1195, %v1230
        %v1388 = vmul.f32 %v1196, %v1235
        %v1389 = vmul.f32 %v1197, %v1240
        %v1390 = vmul.f32 %v1198, %v1245
        %v1391 = vmul.f32 %v1199, %v1250
        %v1392 = vmul.f32 %v1200, %v1255
        %v1393 = vmul.f32 %v1201, %v1260
        %v1394 = vmul.f32 %v1202, %v1265
        %v1395 = vmul.f32 %v1203, %v1270
        %v1396 = vmul.f32 %v1204, %v1275
        %v1397 = vmul.f32 %v1205, %v1280
        %v1398 = vmul.f32 %v1206, %v1285
        %v1399 = vmul.f32 %v1207, %v1290
        %v1400 = vmul.f32 %v1208, %v1295
        %v1401 = vmul.f32 %v1209, %v1300
        %v1402 = vmul.f32 %v1210, %v1305
        %v1403 = vmul.f32 %v1211, %v1310
        %v1404 = vmul.f32 %v1212, %v1315
        %v1405 = vmul.f32 %v1213, %v1320
        %v1406 = vmul.f32 %v1214, %v1325
        %v1407 = vmul.f32 %v1215, %v1330
        %v1408 = vmul.f32 %v1216, %v1335
        %v1409 = vmul.f32 %v1217, %v1340
        %v1410 = vmul.f32 %v1218, %v1345
        %v1411 = vmul.f32 %v1219, %v1350
        %v1412 = vmul.f32 %v1220, %v1355
        %v1413 = vmul.f32 %v1221, %v1360
        %v1414 = vmul.f32 %v1222, %v1365
        %v1415 = vmul.f32 %v1223, %v1370
        %v1416 = vmul.f32 %v1224, %v1375
        %v1417 = vmul.f32 %v1225, %v1380
        %v1418 = vmul.f32 %v1226, %v1385
        %v1419 = vadd.f32 %v1387, %v1388
        %v1420 = vadd.f32 %v1419, %v1389
        %v1421 = vadd.f32 %v1420, %v1390
        %v1422 = vrot.slane %v1421, 4
        %v1423 = vadd.f32 %v1421, %v1422
        %v1424 = vrot.slane %v1423, 2
        %v1425 = vadd.f32 %v1423, %v1424
        %v1426 = vrot.slane %v1425, 1
        %v1427 = vadd.f32 %v1425, %v1426
        %v1428 = vadd.f32 %v1391, %v1392
        %v1429 = vadd.f32 %v1428, %v1393
        %v1430 = vadd.f32 %v1429, %v1394
        %v1431 = vrot.slane %v1430, 4
        %v1432 = vadd.f32 %v1430, %v1431
        %v1433 = vrot.slane %v1432, 2
        %v1434 = vadd.f32 %v1432, %v1433
        %v1435 = vrot.slane %v1434, 1
        %v1436 = vadd.f32 %v1434, %v1435
        %v1437 = vadd.f32 %v1395, %v1396
        %v1438 = vadd.f32 %v1437, %v1397
        %v1439 = vadd.f32 %v1438, %v1398
        %v1440 = vrot.slane %v1439, 4
        %v1441 = vadd.f32 %v1439, %v1440
        %v1442 = vrot.slane %v1441, 2
        %v1443 = vadd.f32 %v1441, %v1442
        %v1444 = vrot.slane %v1443, 1
        %v1445 = vadd.f32 %v1443, %v1444
        %v1446 = vadd.f32 %v1399, %v1400
        %v1447 = vadd.f32 %v1446, %v1401
        %v1448 = vadd.f32 %v1447, %v1402
        %v1449 = vrot.slane %v1448, 4
        %v1450 = vadd.f32 %v1448, %v1449
        %v1451 = vrot.slane %v1450, 2
        %v1452 = vadd.f32 %v1450, %v1451
        %v1453 = vrot.slane %v1452, 1
        %v1454 = vadd.f32 %v1452, %v1453
        %v1455 = vadd.f32 %v1403, %v1404
        %v1456 = vadd.f32 %v1455, %v1405
        %v1457 = vadd.f32 %v1456, %v1406
        %v1458 = vrot.slane %v1457, 4
        %v1459 = vadd.f32 %v1457, %v1458
        %v1460 = vrot.slane %v1459, 2
        %v1461 = vadd.f32 %v1459, %v1460
        %v1462 = vrot.slane %v1461, 1
        %v1463 = vadd.f32 %v1461, %v1462
        %v1464 = vadd.f32 %v1407, %v1408
        %v1465 = vadd.f32 %v1464, %v1409
        %v1466 = vadd.f32 %v1465, %v1410
        %v1467 = vrot.slane %v1466, 4
        %v1468 = vadd.f32 %v1466, %v1467
        %v1469 = vrot.slane %v1468, 2
        %v1470 = vadd.f32 %v1468, %v1469
        %v1471 = vrot.slane %v1470, 1
        %v1472 = vadd.f32 %v1470, %v1471
        %v1473 = vadd.f32 %v1411, %v1412
        %v1474 = vadd.f32 %v1473, %v1413
        %v1475 = vadd.f32 %v1474, %v1414
        %v1476 = vrot.slane %v1475, 4
        %v1477 = vadd.f32 %v1475, %v1476
        %v1478 = vrot.slane %v1477, 2
        %v1479 = vadd.f32 %v1477, %v1478
        %v1480 = vrot.slane %v1479, 1
        %v1481 = vadd.f32 %v1479, %v1480
        %v1482 = vadd.f32 %v1415, %v1416
        %v1483 = vadd.f32 %v1482, %v1417
        %v1484 = vadd.f32 %v1483, %v1418
        %v1485 = vrot.slane %v1484, 4
        %v1486 = vadd.f32 %v1484, %v1485
        %v1487 = vrot.slane %v1486, 2
        %v1488 = vadd.f32 %v1486, %v1487
        %v1489 = vrot.slane %v1488, 1
        %v1490 = vadd.f32 %v1488, %v1489
        %v1499 = vsel %vm818, %v1436, %v1427
        %v1500 = vsel %vm820, %v1445, %v1499
        %v1501 = vsel %vm822, %v1454, %v1500
        %v1502 = vsel %vm824, %v1463, %v1501
        %v1503 = vsel %vm826, %v1472, %v1502
        %v1504 = vsel %vm828, %v1481, %v1503
        %v1505 = vsel %vm830, %v1490, %v1504
        %1507 = vst [vmem:[%s264] sm:$0xff] %v1505
        %s1508 = sand.u32 %s143, 1
        %s1509 = scalar_lea.sflag [#allocation5], %s1508
        %s1510 = sand.u32 %s143, 1
        %s1511 = smul.addr %s1510, 8
        %s1512 = scalar_lea.vmem [#allocation8], %s1511
        // Predicated region
        $region49: #{tpu_custom_call.1} parent=39 // pred_check
          %p1513 = pneg %p153
        $region50: #{tpu_custom_call.1} parent=39 // pred_check_branch
          %1515 = sbr.rel (%p1513) target = $region52
        $region51: #{tpu_custom_call.1} parent=39 // pred_region
          %1517 = vsyncadd %s1509, 0
          %s1518 = smul.addr %s25, 8
          %s1519 = scalar_lea.hbm %s5, %s1518
          %s1521 = sshll.u32 %s1512, 4
          %s1522 = int_to_ptr.vmem [resolvable:$true] %s1521
          %s1523 = sshll.u32 %s1519, 4
          %s1524 = int_to_ptr.hbm [resolvable:$true] %s1523
          %1526 = dma.vmem_to_hbm [thread:$0]  %s1522, 128, %s1524, %s1509
        $region52: #{tpu_custom_call.1} parent=39 // pred_fallthru
          _
      $region40: #{tpu_custom_call.1} parent=5 // pred_fallthru
        _
      %p1527 = scmp.le.s32.totalorder 2, %s20
      // Predicated region
      $region53: #{tpu_custom_call.1} parent=5 // pred_check
        %p1528 = pneg %p1527
      $region54: #{tpu_custom_call.1} parent=5 // pred_check_branch
        %1530 = sbr.rel (%p1528) target = $region56
      $region55: #{tpu_custom_call.1} parent=5 // pred_region
        %s1531 = ssub.s32 %s20, 2
        // Predicated region
        $region57: #{tpu_custom_call.1} parent=55 // pred_check
          %p1532 = pneg %p159
        $region58: #{tpu_custom_call.1} parent=55 // pred_check_branch
          %1534 = sbr.rel (%p1532) target = $region60
        $region59: #{tpu_custom_call.1} parent=55 // pred_region
          %s1535 = sand.u32 %s144, 1
          %s1536 = scalar_lea.sflag [#allocation5], %s1535
          %s1537 = sand.u32 %s144, 1
          %s1538 = smul.addr %s1537, 8
          %s1539 = scalar_lea.vmem [#allocation8], %s1538
          %1541 = dma.done %s1536, 128
        $region60: #{tpu_custom_call.1} parent=55 // pred_fallthru
          _
      $region56: #{tpu_custom_call.1} parent=5 // pred_fallthru
        _
    $region6: #{tpu_custom_call.1} parent=1 // loop_footer
      %s24 = sadd.s32 1, %s20
    $region7: #{tpu_custom_call.1} parent=1 // loop_footer_branch
      %19 = sbr.rel target = $region3
    $region8: #{tpu_custom_call.1} parent=1 // loop_exit
      _
    %1542 = vsyncpa [#allocation4], 1
    %s1543 = scalar_lea.sflag [#allocation4], 1
    %1544 = vsyncpa %s1543, 1
    %1545 = vsyncpa [#allocation7], 1
    %1546 = vsyncpa [#allocation5], 1
    %s1547 = scalar_lea.sflag [#allocation5], 1
    %1548 = vsyncpa %s1547, 1

</llo_original>
